<compile_context>
chip_gen: v5e
topology: v5e:2x2
jax: 0.10.0
libtpu: 0.0.40
codegen_flags: <defaults>
</compile_context>

<pallas_src>
import functools

import jax
import jax.numpy as jnp
from jax import lax
from jax.experimental import pallas as pl
from jax.experimental.pallas import tpu as pltpu

HEADS = ("cal", "mass", "fat", "carb", "protein")
NUM_HEADS = len(HEADS)
HEADS_PAD = 8  # lane-padded head axis (>= 8 -> dense output stores)


def _round_up(x, m):
    return (x + m - 1) // m * m


# ----------------------------- kernels ------------------------------------ #

def _regressor_depth3_kernel(x_ref, w1_ref, b1_ref, w2f_ref, b2f_ref,
                             w3f_ref, b3p_ref, o_ref, *, hidden):
    """One batch tile: shared trunk + 5 fused depth=3 heads."""
    md = w1_ref.dtype                                   # MXU dtype (bf16)
    # shared trunk: h = relu(x @ W1 + b1)                (TB, H)  f32
    h = jnp.dot(x_ref[...].astype(md), w1_ref[...],
                preferred_element_type=jnp.float32)
    h = jnp.maximum(h + b1_ref[...], 0.0)
    # all 5 head mid-layers fused into one wide matmul   (TB, 5H) f32
    h2 = jnp.dot(h.astype(md), w2f_ref[...],
                 preferred_element_type=jnp.float32)
    h2 = jnp.maximum(h2 + b2f_ref[...], 0.0)
    # final per-head Linear(H, 1): VPU multiply + segmented lane reduce
    # (replaces the mostly-zero (5H, 5) block-diagonal MXU matmul).
    z = h2 * w3f_ref[...]                                # (TB, 5H) f32
    lane = lax.broadcasted_iota(jnp.int32, (1, HEADS_PAD), 1)
    y = b3p_ref[...]                                     # (1, HEADS_PAD) f32
    for d in range(NUM_HEADS):
        yd = jnp.sum(z[:, d * hidden:(d + 1) * hidden], axis=-1,
                     keepdims=True)                      # (TB, 1)
        y = y + yd * (lane == d).astype(jnp.float32)     # place in lane d
    o_ref[...] = y.astype(o_ref.dtype)


def _regressor_depth2_kernel(x_ref, w1_ref, b1_ref, wrp_ref, brp_ref, o_ref):
    """One batch tile: shared trunk + 5 packed Linear(H, 1) heads (depth=2)."""
    md = w1_ref.dtype
    h = jnp.dot(x_ref[...].astype(md), w1_ref[...],
                preferred_element_type=jnp.float32)
    h = jnp.maximum(h + b1_ref[...], 0.0)
    # 5 heads packed into (H, HEADS_PAD) -> one lane-dense output store
    y = jnp.dot(h.astype(md), wrp_ref[...],
                preferred_element_type=jnp.float32) + brp_ref[...]
    o_ref[...] = y.astype(o_ref.dtype)


# --------------------------- weight packing --------------------------------- #

def pack_params(params, matmul_dtype=jnp.bfloat16):
    """One-time layout plumbing: fuse per-head weights into lane-dense slabs."""
    H = params["w1"].shape[1]

    # depth=3 mid layer: (5,H,H) -> (H, 5H), columns [d*H:(d+1)*H] == W2_d
    w2f = jnp.transpose(params["w2"], (1, 0, 2)).reshape(H, NUM_HEADS * H)
    b2f = params["b2"].reshape(1, NUM_HEADS * H).astype(jnp.float32)

    # depth=3 final Linear(H,1): flat (1, 5H) weight row + lane-padded bias
    w3f = params["w3"][:, :, 0].reshape(1, NUM_HEADS * H).astype(jnp.float32)
    b3p = jnp.zeros((1, HEADS_PAD), jnp.float32).at[0, :NUM_HEADS].set(
        params["b3"][:, 0])

    # depth=2: (5,H,1) -> (H, HEADS_PAD), padded columns zero
    wrp = jnp.zeros((H, HEADS_PAD), params["wr"].dtype).at[:, :NUM_HEADS].set(
        jnp.transpose(params["wr"][:, :, 0]))
    brp = jnp.zeros((1, HEADS_PAD), jnp.float32).at[0, :NUM_HEADS].set(
        params["br"][:, 0])

    return {
        "hidden_dim": H,
        "w1": params["w1"].astype(matmul_dtype),
        "b1": params["b1"].astype(jnp.float32),
        "w2f": w2f.astype(matmul_dtype), "b2f": b2f,
        "w3f": w3f, "b3p": b3p,
        "wrp": wrp.astype(matmul_dtype), "brp": brp,
    }


# ----------------------------- wrapper ------------------------------------ #

def regressor_forward(x, packed, depth=3, block_b=256):
    """x: (B, in_dim). Returns the lane-dense (B, NUM_HEADS) slab.

    Split into the per-head dict only where consumers need it (split_heads).
    """
    # TODO(synk): for tiny B/hidden this head is pure launch overhead; prefer a
    # plain XLA path (or fuse into the upstream pooling) in that regime.
    B, in_dim = x.shape
    H = int(packed["hidden_dim"])
    dt = x.dtype

    TB = min(_round_up(block_b, 8), _round_up(B, 8))  # batch tile, multiple of 8
    B_pad = _round_up(B, TB)
    if B_pad != B:
        x = jnp.pad(x, ((0, B_pad - B), (0, 0)))
    grid = (B_pad // TB,)

    # Blocked specs default to VMEM residency; weights use a constant index_map
    # so the same block is reused (not re-fetched) across grid steps.
    x_spec = pl.BlockSpec((TB, in_dim), lambda i: (i, 0))
    o_spec = pl.BlockSpec((TB, HEADS_PAD), lambda i: (i, 0))

    def wspec(arr):
        nd = arr.ndim
        return pl.BlockSpec(arr.shape, lambda i, _nd=nd: (0,) * _nd)

    if depth == 3:
        kernel = functools.partial(_regressor_depth3_kernel, hidden=H)
        weights = (packed["w1"], packed["b1"], packed["w2f"], packed["b2f"],
                   packed["w3f"], packed["b3p"])
        flops = 2 * B_pad * (in_dim * H + H * NUM_HEADS * H + NUM_HEADS * H)
    elif depth == 2:
        kernel = _regressor_depth2_kernel
        weights = (packed["w1"], packed["b1"], packed["wrp"], packed["brp"])
        flops = 2 * B_pad * (in_dim * H + H * HEADS_PAD)
    else:
        raise ValueError(f"Invalid depth: {depth}")

    weight_bytes = sum(w.size * jnp.dtype(w.dtype).itemsize for w in weights)
    tile_bytes = (TB * in_dim + TB * HEADS_PAD) * jnp.dtype(dt).itemsize
    interm_bytes = TB * (H + NUM_HEADS * H) * 4
    needed = weight_bytes + 2 * tile_bytes + 2 * interm_bytes
    vmem_limit = int(min(64 << 20, max(2 * needed, 16 << 20)))  # v7x-safe cap

    bytes_accessed = int(weight_bytes
                         + B_pad * in_dim * jnp.dtype(dt).itemsize
                         + B_pad * HEADS_PAD * jnp.dtype(dt).itemsize)

    out = pl.pallas_call(
        kernel,
        out_shape=jax.ShapeDtypeStruct((B_pad, HEADS_PAD), dt),
        grid_spec=pltpu.PrefetchScalarGridSpec(
            num_scalar_prefetch=0,
            grid=grid,
            in_specs=[x_spec] + [wspec(w) for w in weights],
            out_specs=o_spec,
        ),
        compiler_params=pltpu.CompilerParams(
            dimension_semantics=("parallel",),  # v7x: shard batch over both TCs
            vmem_limit_bytes=vmem_limit,
        ),
        cost_estimate=pl.CostEstimate(flops=int(flops), transcendentals=0,
                                      bytes_accessed=bytes_accessed),
    )(x, *weights)

    return out[:B, :NUM_HEADS]  # drop batch / lane padding -> (B, 5) slab


def split_heads(slab):
    """(B, NUM_HEADS) slab -> per-head dict of (B, 1), matching the torch API."""
    return {name: slab[:, i:i + 1] for i, name in enumerate(HEADS)}


# --------------------------- param init ------------------------------------ #

def init_params(key, in_dim, hidden_dim, dtype=jnp.float32):
    """Deterministic init mimicking nn.Linear (uniform +-1/sqrt(fan_in))."""
    ks = jax.random.split(key, 10)

    def lin(k, fan_in, shape):
        bound = 1.0 / jnp.sqrt(fan_in)
        return jax.random.uniform(k, shape, dtype, minval=-bound, maxval=bound)

    return {
        # shared fc1
        "w1": lin(ks[0], in_dim, (in_dim, hidden_dim)),
        "b1": lin(ks[1], in_dim, (1, hidden_dim)),
        # depth=3 heads (stacked over 5 heads)
        "w2": lin(ks[2], hidden_dim, (NUM_HEADS, hidden_dim, hidden_dim)),
        "b2": lin(ks[3], hidden_dim, (NUM_HEADS, hidden_dim)),
        "w3": lin(ks[4], hidden_dim, (NUM_HEADS, hidden_dim, 1)),
        "b3": lin(ks[5], hidden_dim, (NUM_HEADS, 1)),
        # depth=2 heads
        "wr": lin(ks[6], hidden_dim, (NUM_HEADS, hidden_dim, 1)),
        "br": lin(ks[7], hidden_dim, (NUM_HEADS, 1)),
    }


# --------------------------- reference (plain JAX) -------------------------- #

def regressor_reference(x, params, depth=3, matmul_dtype=jnp.bfloat16):
    """Per-head reference with the same bf16-matmul / f32-accumulate discipline."""
    md = matmul_dtype
    h = jnp.dot(x.astype(md), params["w1"].astype(md),
                preferred_element_type=jnp.float32) + params["b1"]
    h = jnp.maximum(h, 0.0)
    out = {}
    for i, name in enumerate(HEADS):
        if depth == 3:
            h2 = jnp.dot(h.astype(md), params["w2"][i].astype(md),
                         preferred_element_type=jnp.float32) + params["b2"][i][None, :]
            h2 = jnp.maximum(h2, 0.0)
            y = h2 @ params["w3"][i] + params["b3"][i][None, :]
        else:
            y = jnp.dot(h.astype(md), params["wr"][i].astype(md),
                        preferred_element_type=jnp.float32) + params["br"][i][None, :]
        out[name] = y
    return out


# ------------------------------- main --------------------------------------- #

if __name__ == "__main__":
    IN_DIM, HIDDEN = 32, 32
    key = jax.random.PRNGKey(0)
    kx, kp, kx2 = jax.random.split(key, 3)

    params = init_params(kp, IN_DIM, HIDDEN)
    packed = pack_params(params, matmul_dtype=jnp.bfloat16)

    ok = True
    TOL = dict(rtol=2e-3, atol=2e-3)  # bf16 matmul inputs, f32 accumulation

    # config 1: B=8, single grid step, both depth paths
    x = jax.random.normal(kx, (8, IN_DIM), dtype=jnp.float32)
    for depth in (3, 2):
        slab = regressor_forward(x, packed, depth=depth)
        jax.block_until_ready(slab)
        out = split_heads(slab)
        ref = regressor_reference(x, params, depth=depth)
        for name in HEADS:
            ok &= out[name].shape == (8, 1)
            ok &= bool(jnp.allclose(out[name], ref[name], **TOL))

    # config 2: B=20 with a multi-step batch grid (TB=8 -> grid=(3,), pad to 24)
    x2 = jax.random.normal(kx2, (20, IN_DIM), dtype=jnp.float32)
    slab2 = regressor_forward(x2, packed, depth=3, block_b=8)
    jax.block_until_ready(slab2)
    out2 = split_heads(slab2)
    ref2 = regressor_reference(x2, params, depth=3)
    for name in HEADS:
        ok &= out2[name].shape == (20, 1)
        ok &= bool(jnp.allclose(out2[name], ref2[name], **TOL))

    if ok:
        print("KERNEL_OK")
    else:
        raise SystemExit("mismatch vs reference")
</pallas_src>

<mosaic_0001>
module attributes {stable_mosaic.version = 11 : i64} {
  func.func @_regressor_depth3_kernel(%arg0: i32, %arg1: memref<8x32xf32, #tpu.memory_space<vmem>>, %arg2: memref<32x32xbf16, #tpu.memory_space<vmem>>, %arg3: memref<1x32xf32, #tpu.memory_space<vmem>>, %arg4: memref<32x160xbf16, #tpu.memory_space<vmem>>, %arg5: memref<1x160xf32, #tpu.memory_space<vmem>>, %arg6: memref<1x160xf32, #tpu.memory_space<vmem>>, %arg7: memref<1x8xf32, #tpu.memory_space<vmem>>, %arg8: memref<8x8xf32, #tpu.memory_space<vmem>>) attributes {dimension_semantics = [#tpu.dimension_semantics<parallel>], iteration_bounds = array<i64: 1>, scalar_prefetch = 0 : i64, scratch_operands = 0 : i64, tpu.core_type = #tpu.core_type<tc>, window_params = [{transform_indices = @transform_0, window_bounds = array<i64: 8, 32>}, {pipeline_mode = #tpu.pipeline_mode<synchronous>, transform_indices = @transform_1, window_bounds = array<i64: 32, 32>}, {pipeline_mode = #tpu.pipeline_mode<synchronous>, transform_indices = @transform_2, window_bounds = array<i64: 1, 32>}, {pipeline_mode = #tpu.pipeline_mode<synchronous>, transform_indices = @transform_3, window_bounds = array<i64: 32, 160>}, {pipeline_mode = #tpu.pipeline_mode<synchronous>, transform_indices = @transform_4, window_bounds = array<i64: 1, 160>}, {pipeline_mode = #tpu.pipeline_mode<synchronous>, transform_indices = @transform_5, window_bounds = array<i64: 1, 160>}, {pipeline_mode = #tpu.pipeline_mode<synchronous>, transform_indices = @transform_6, window_bounds = array<i64: 1, 8>}, {transform_indices = @transform_7, window_bounds = array<i64: 8, 8>}]} {
    %c0 = arith.constant 0 : index
    %c0_0 = arith.constant 0 : index
    %0 = vector.load %arg1[%c0, %c0_0] : memref<8x32xf32, #tpu.memory_space<vmem>>, vector<8x32xf32>
    %1 = arith.truncf %0 : vector<8x32xf32> to vector<8x32xbf16>
    %c0_1 = arith.constant 0 : index
    %c0_2 = arith.constant 0 : index
    %2 = vector.load %arg2[%c0_1, %c0_2] : memref<32x32xbf16, #tpu.memory_space<vmem>>, vector<32x32xbf16>
    %cst = arith.constant dense<0.000000e+00> : vector<8x32xf32>
    %3 = tpu.matmul %1, %2, %cst {dimension_numbers = #tpu.dot_dimension_numbers<[1], [0], [0], [1], [0, 0, 1, 1], [], []>} : vector<8x32xbf16>, vector<32x32xbf16>, vector<8x32xf32> -> vector<8x32xf32>
    %c0_3 = arith.constant 0 : index
    %c0_4 = arith.constant 0 : index
    %4 = vector.load %arg3[%c0_3, %c0_4] : memref<1x32xf32, #tpu.memory_space<vmem>>, vector<1x32xf32>
    %5 = vector.broadcast %4 : vector<1x32xf32> to vector<8x32xf32>
    %6 = arith.addf %3, %5 : vector<8x32xf32>
    %cst_5 = arith.constant 0.000000e+00 : f32
    %7 = vector.broadcast %cst_5 : f32 to vector<8x32xf32>
    %8 = arith.maximumf %6, %7 : vector<8x32xf32>
    %9 = arith.truncf %8 : vector<8x32xf32> to vector<8x32xbf16>
    %c0_6 = arith.constant 0 : index
    %c0_7 = arith.constant 0 : index
    %10 = vector.load %arg4[%c0_6, %c0_7] : memref<32x160xbf16, #tpu.memory_space<vmem>>, vector<32x160xbf16>
    %cst_8 = arith.constant dense<0.000000e+00> : vector<8x160xf32>
    %11 = tpu.matmul %9, %10, %cst_8 {dimension_numbers = #tpu.dot_dimension_numbers<[1], [0], [0], [1], [0, 0, 1, 1], [], []>} : vector<8x32xbf16>, vector<32x160xbf16>, vector<8x160xf32> -> vector<8x160xf32>
    %c0_9 = arith.constant 0 : index
    %c0_10 = arith.constant 0 : index
    %12 = vector.load %arg5[%c0_9, %c0_10] : memref<1x160xf32, #tpu.memory_space<vmem>>, vector<1x160xf32>
    %13 = vector.broadcast %12 : vector<1x160xf32> to vector<8x160xf32>
    %14 = arith.addf %11, %13 : vector<8x160xf32>
    %cst_11 = arith.constant 0.000000e+00 : f32
    %15 = vector.broadcast %cst_11 : f32 to vector<8x160xf32>
    %16 = arith.maximumf %14, %15 : vector<8x160xf32>
    %c0_12 = arith.constant 0 : index
    %c0_13 = arith.constant 0 : index
    %17 = vector.load %arg6[%c0_12, %c0_13] : memref<1x160xf32, #tpu.memory_space<vmem>>, vector<1x160xf32>
    %18 = vector.broadcast %17 : vector<1x160xf32> to vector<8x160xf32>
    %19 = arith.mulf %16, %18 : vector<8x160xf32>
    %20 = tpu.iota {dimensions = array<i32: 1>} : vector<1x8xi32>
    %c0_14 = arith.constant 0 : index
    %c0_15 = arith.constant 0 : index
    %21 = vector.load %arg7[%c0_14, %c0_15] : memref<1x8xf32, #tpu.memory_space<vmem>>, vector<1x8xf32>
    %22 = vector.extract_strided_slice %19 {offsets = [0, 0], sizes = [8, 32], strides = [1, 1]} : vector<8x160xf32> to vector<8x32xf32>
    %cst_16 = arith.constant dense<0.000000e+00> : vector<8xf32>
    %23 = vector.multi_reduction <add>, %22, %cst_16 [1] : vector<8x32xf32> to vector<8xf32>
    %24 = vector.shape_cast %23 : vector<8xf32> to vector<8x1xf32>
    %c0_i32 = arith.constant 0 : i32
    %25 = vector.broadcast %c0_i32 : i32 to vector<1x8xi32>
    %26 = arith.cmpi eq, %20, %25 : vector<1x8xi32>
    %27 = arith.extui %26 : vector<1x8xi1> to vector<1x8xi32>
    %28 = arith.sitofp %27 : vector<1x8xi32> to vector<1x8xf32>
    %29 = vector.broadcast %24 : vector<8x1xf32> to vector<8x8xf32>
    %30 = vector.broadcast %28 : vector<1x8xf32> to vector<8x8xf32>
    %31 = arith.mulf %29, %30 : vector<8x8xf32>
    %32 = vector.broadcast %21 : vector<1x8xf32> to vector<8x8xf32>
    %33 = arith.addf %32, %31 : vector<8x8xf32>
    %34 = vector.extract_strided_slice %19 {offsets = [0, 32], sizes = [8, 32], strides = [1, 1]} : vector<8x160xf32> to vector<8x32xf32>
    %cst_17 = arith.constant dense<0.000000e+00> : vector<8xf32>
    %35 = vector.multi_reduction <add>, %34, %cst_17 [1] : vector<8x32xf32> to vector<8xf32>
    %36 = vector.shape_cast %35 : vector<8xf32> to vector<8x1xf32>
    %c1_i32 = arith.constant 1 : i32
    %37 = vector.broadcast %c1_i32 : i32 to vector<1x8xi32>
    %38 = arith.cmpi eq, %20, %37 : vector<1x8xi32>
    %39 = arith.extui %38 : vector<1x8xi1> to vector<1x8xi32>
    %40 = arith.sitofp %39 : vector<1x8xi32> to vector<1x8xf32>
    %41 = vector.broadcast %36 : vector<8x1xf32> to vector<8x8xf32>
    %42 = vector.broadcast %40 : vector<1x8xf32> to vector<8x8xf32>
    %43 = arith.mulf %41, %42 : vector<8x8xf32>
    %44 = arith.addf %33, %43 : vector<8x8xf32>
    %45 = vector.extract_strided_slice %19 {offsets = [0, 64], sizes = [8, 32], strides = [1, 1]} : vector<8x160xf32> to vector<8x32xf32>
    %cst_18 = arith.constant dense<0.000000e+00> : vector<8xf32>
    %46 = vector.multi_reduction <add>, %45, %cst_18 [1] : vector<8x32xf32> to vector<8xf32>
    %47 = vector.shape_cast %46 : vector<8xf32> to vector<8x1xf32>
    %c2_i32 = arith.constant 2 : i32
    %48 = vector.broadcast %c2_i32 : i32 to vector<1x8xi32>
    %49 = arith.cmpi eq, %20, %48 : vector<1x8xi32>
    %50 = arith.extui %49 : vector<1x8xi1> to vector<1x8xi32>
    %51 = arith.sitofp %50 : vector<1x8xi32> to vector<1x8xf32>
    %52 = vector.broadcast %47 : vector<8x1xf32> to vector<8x8xf32>
    %53 = vector.broadcast %51 : vector<1x8xf32> to vector<8x8xf32>
    %54 = arith.mulf %52, %53 : vector<8x8xf32>
    %55 = arith.addf %44, %54 : vector<8x8xf32>
    %56 = vector.extract_strided_slice %19 {offsets = [0, 96], sizes = [8, 32], strides = [1, 1]} : vector<8x160xf32> to vector<8x32xf32>
    %cst_19 = arith.constant dense<0.000000e+00> : vector<8xf32>
    %57 = vector.multi_reduction <add>, %56, %cst_19 [1] : vector<8x32xf32> to vector<8xf32>
    %58 = vector.shape_cast %57 : vector<8xf32> to vector<8x1xf32>
    %c3_i32 = arith.constant 3 : i32
    %59 = vector.broadcast %c3_i32 : i32 to vector<1x8xi32>
    %60 = arith.cmpi eq, %20, %59 : vector<1x8xi32>
    %61 = arith.extui %60 : vector<1x8xi1> to vector<1x8xi32>
    %62 = arith.sitofp %61 : vector<1x8xi32> to vector<1x8xf32>
    %63 = vector.broadcast %58 : vector<8x1xf32> to vector<8x8xf32>
    %64 = vector.broadcast %62 : vector<1x8xf32> to vector<8x8xf32>
    %65 = arith.mulf %63, %64 : vector<8x8xf32>
    %66 = arith.addf %55, %65 : vector<8x8xf32>
    %67 = vector.extract_strided_slice %19 {offsets = [0, 128], sizes = [8, 32], strides = [1, 1]} : vector<8x160xf32> to vector<8x32xf32>
    %cst_20 = arith.constant dense<0.000000e+00> : vector<8xf32>
    %68 = vector.multi_reduction <add>, %67, %cst_20 [1] : vector<8x32xf32> to vector<8xf32>
    %69 = vector.shape_cast %68 : vector<8xf32> to vector<8x1xf32>
    %c4_i32 = arith.constant 4 : i32
    %70 = vector.broadcast %c4_i32 : i32 to vector<1x8xi32>
    %71 = arith.cmpi eq, %20, %70 : vector<1x8xi32>
    %72 = arith.extui %71 : vector<1x8xi1> to vector<1x8xi32>
    %73 = arith.sitofp %72 : vector<1x8xi32> to vector<1x8xf32>
    %74 = vector.broadcast %69 : vector<8x1xf32> to vector<8x8xf32>
    %75 = vector.broadcast %73 : vector<1x8xf32> to vector<8x8xf32>
    %76 = arith.mulf %74, %75 : vector<8x8xf32>
    %77 = arith.addf %66, %76 : vector<8x8xf32>
    %c0_21 = arith.constant 0 : index
    %c0_22 = arith.constant 0 : index
    %78 = vector.load %arg8[%c0_21, %c0_22] : memref<8x8xf32, #tpu.memory_space<vmem>>, vector<8x8xf32>
    tpu.vector_store %arg8[%c0_21, %c0_22], %77 {strides = array<i32>} : memref<8x8xf32, #tpu.memory_space<vmem>>, vector<8x8xf32>,
    return
  }
  func.func @transform_0(%arg0: i32) -> (i32, i32) {
    %c0_i32 = arith.constant 0 : i32
    %c0_i32_0 = arith.constant 0 : i32
    return %arg0, %c0_i32 : i32, i32
  }
  func.func @transform_1(%arg0: i32) -> (i32, i32) {
    %c0_i32 = arith.constant 0 : i32
    %c0_i32_0 = arith.constant 0 : i32
    %c0_i32_1 = arith.constant 0 : i32
    return %c0_i32, %c0_i32_0 : i32, i32
  }
  func.func @transform_2(%arg0: i32) -> (i32, i32) {
    %c0_i32 = arith.constant 0 : i32
    %c0_i32_0 = arith.constant 0 : i32
    %c0_i32_1 = arith.constant 0 : i32
    return %c0_i32, %c0_i32_0 : i32, i32
  }
  func.func @transform_3(%arg0: i32) -> (i32, i32) {
    %c0_i32 = arith.constant 0 : i32
    %c0_i32_0 = arith.constant 0 : i32
    %c0_i32_1 = arith.constant 0 : i32
    return %c0_i32, %c0_i32_0 : i32, i32
  }
  func.func @transform_4(%arg0: i32) -> (i32, i32) {
    %c0_i32 = arith.constant 0 : i32
    %c0_i32_0 = arith.constant 0 : i32
    %c0_i32_1 = arith.constant 0 : i32
    return %c0_i32, %c0_i32_0 : i32, i32
  }
  func.func @transform_5(%arg0: i32) -> (i32, i32) {
    %c0_i32 = arith.constant 0 : i32
    %c0_i32_0 = arith.constant 0 : i32
    %c0_i32_1 = arith.constant 0 : i32
    return %c0_i32, %c0_i32_0 : i32, i32
  }
  func.func @transform_6(%arg0: i32) -> (i32, i32) {
    %c0_i32 = arith.constant 0 : i32
    %c0_i32_0 = arith.constant 0 : i32
    %c0_i32_1 = arith.constant 0 : i32
    return %c0_i32, %c0_i32_0 : i32, i32
  }
  func.func @transform_7(%arg0: i32) -> (i32, i32) {
    %c0_i32 = arith.constant 0 : i32
    %c0_i32_0 = arith.constant 0 : i32
    return %arg0, %c0_i32 : i32, i32
  }
}

</mosaic_0001>

<llo_original>
// kernel: tpu_custom_call.1
$region0: #{tpu_custom_call.1}
  #allocation0 [shape = 'u32[]', space=smem, size = 0x4, offset = 0x4, fixed_abs, tag = 'smem constant byte address 0x4 - core index']
  #allocation1 [shape = 'u32[72,128]{1,0:T(1,128)}', space=vmem, size = 0x9000, scoped, tag = 'internal scratch']
  %s0 = inlined_call_operand.hbm [shape: f32[8,32], index: 0, kind: input, shape index: {}]
  %s1 = inlined_call_operand.hbm [shape: bf16[32,32], index: 1, kind: input, shape index: {}]
  %s2 = inlined_call_operand.hbm [shape: f32[1,32], index: 2, kind: input, shape index: {}]
  %s3 = inlined_call_operand.hbm [shape: bf16[32,160], index: 3, kind: input, shape index: {}]
  %s4 = inlined_call_operand.vmem [shape: f32[1,160], index: 4, kind: input, shape index: {}]
  %s5 = inlined_call_operand.vmem [shape: f32[1,160], index: 5, kind: input, shape index: {}]
  %s6 = inlined_call_operand.vmem [shape: f32[1,8], index: 6, kind: input, shape index: {}]
  %s7 = inlined_call_operand.hbm [shape: f32[8,8], index: 7, kind: output, shape index: {}]
  %s8 = sld [smem:[#allocation0]]
  $region54: #{tpu_custom_call.1} parent=0
    _
  %s10 = ssub.s32 1, %s8
  %s11 = scalar_select 0, %s10, %s8
  $region1: #{tpu_custom_call.1} parent=0
    #allocation2 [shape = 'u8[4096]{0}', space=vmem, size = 0x1000, scoped, tag = 'input window, operand 0, single buffered']
    #allocation3 [shape = 's32[1]{0}', space=sflag, size = 0x4, scoped, tag = 'scoped memory for tpu_custom_call.1']
    #allocation4 [shape = 's32[1]{0}', space=sflag, size = 0x4, scoped, tag = 'scoped memory for tpu_custom_call.1']
    #allocation5 [shape = 'u8[8192]{0}', space=vmem, size = 0x2000, scoped, tag = 'input window, operand 1, single buffered']
    #allocation6 [shape = 's32[1]{0}', space=sflag, size = 0x4, scoped, tag = 'scoped memory for tpu_custom_call.1']
    #allocation7 [shape = 'u8[512]{0}', space=vmem, size = 0x400, scoped, tag = 'input window, operand 2, single buffered']
    #allocation8 [shape = 'u8[16384]{0}', space=vmem, size = 0x4000, scoped, tag = 'input window, operand 3, single buffered']
    #allocation9 [shape = 's32[1]{0}', space=sflag, size = 0x4, scoped, tag = 'scoped memory for tpu_custom_call.1']
    #allocation10 [shape = 'u8[4096]{0}', space=vmem, size = 0x1000, scoped, tag = 'output window, operand 0, single buffered']
    %12 = vsyncpa [#allocation3], 0
    %13 = vsyncpa [#allocation6], 0
    %14 = vsyncpa [#allocation9], 0
    %15 = vsyncpa [#allocation4], 0
    // Predicated region
    $region2: #{tpu_custom_call.1} parent=1 // pred_check
      _
    $region3: #{tpu_custom_call.1} parent=1 // pred_check_branch
      %17 = sbr.rel (0) target = $region5
    $region4: #{tpu_custom_call.1} parent=1 // pred_region
      %19 = vsyncadd [#allocation3], 0
      %s21 = sshll.u32 %s0, 4
      %s22 = int_to_ptr.hbm [resolvable:$true] %s21
      %s23 = sshll.u32 [#allocation2], 4
      %s24 = int_to_ptr.vmem [resolvable:$true] %s23
      %26 = dma.hbm_to_vmem [thread:$0]  %s22, 128, %s24, [#allocation3]
    $region5: #{tpu_custom_call.1} parent=1 // pred_fallthru
      _
    // Predicated region
    $region6: #{tpu_custom_call.1} parent=1 // pred_check
      _
    $region7: #{tpu_custom_call.1} parent=1 // pred_check_branch
      %28 = sbr.rel (0) target = $region9
    $region8: #{tpu_custom_call.1} parent=1 // pred_region
      %30 = vsyncadd [#allocation6], 0
      %s31 = sshll.u32 %s1, 4
      %s32 = int_to_ptr.hbm [resolvable:$true] %s31
      %s33 = sshll.u32 [#allocation5], 4
      %s34 = int_to_ptr.vmem [resolvable:$true] %s33
      %39 = dma.hbm_to_vmem [thread:$0]  %s32, 256, %s34, [#allocation6], 64, 64, 4
    $region9: #{tpu_custom_call.1} parent=1 // pred_fallthru
      _
    // Predicated region
    $region10: #{tpu_custom_call.1} parent=1 // pred_check
      _
    $region11: #{tpu_custom_call.1} parent=1 // pred_check_branch
      %41 = sbr.rel (0) target = $region13
    $region12: #{tpu_custom_call.1} parent=1 // pred_region
      %43 = vsyncadd [#allocation6], 0
      %s45 = sshll.u32 %s2, 4
      %s46 = int_to_ptr.hbm [resolvable:$true] %s45
      %s47 = sshll.u32 [#allocation7], 4
      %s48 = int_to_ptr.vmem [resolvable:$true] %s47
      %50 = dma.hbm_to_vmem [thread:$0]  %s46, 16, %s48, [#allocation6]
    $region13: #{tpu_custom_call.1} parent=1 // pred_fallthru
      _
    // Predicated region
    $region14: #{tpu_custom_call.1} parent=1 // pred_check
      _
    $region15: #{tpu_custom_call.1} parent=1 // pred_check_branch
      %52 = sbr.rel (0) target = $region17
    $region16: #{tpu_custom_call.1} parent=1 // pred_region
      %54 = vsyncadd [#allocation9], 0
      %s55 = sshll.u32 %s3, 4
      %s56 = int_to_ptr.hbm [resolvable:$true] %s55
      %s57 = sshll.u32 [#allocation8], 4
      %s58 = int_to_ptr.vmem [resolvable:$true] %s57
      %63 = dma.hbm_to_vmem [thread:$0]  %s56, 512, %s58, [#allocation9], 128, 128, 8
    $region17: #{tpu_custom_call.1} parent=1 // pred_fallthru
      _
    // Predicated region
    $region18: #{tpu_custom_call.1} parent=1 // pred_check
      _
    $region19: #{tpu_custom_call.1} parent=1 // pred_check_branch
      %65 = sbr.rel (0) target = $region21
    $region20: #{tpu_custom_call.1} parent=1 // pred_region
      _
    $region21: #{tpu_custom_call.1} parent=1 // pred_fallthru
      _
    // Predicated region
    $region22: #{tpu_custom_call.1} parent=1 // pred_check
      _
    $region23: #{tpu_custom_call.1} parent=1 // pred_check_branch
      %67 = sbr.rel (0) target = $region25
    $region24: #{tpu_custom_call.1} parent=1 // pred_region
      _
    $region25: #{tpu_custom_call.1} parent=1 // pred_fallthru
      _
    // Predicated region
    $region26: #{tpu_custom_call.1} parent=1 // pred_check
      _
    $region27: #{tpu_custom_call.1} parent=1 // pred_check_branch
      %69 = sbr.rel (0) target = $region29
    $region28: #{tpu_custom_call.1} parent=1 // pred_region
      _
    $region29: #{tpu_custom_call.1} parent=1 // pred_fallthru
      _
    // Predicated region
    $region30: #{tpu_custom_call.1} parent=1 // pred_check
      _
    $region31: #{tpu_custom_call.1} parent=1 // pred_check_branch
      %71 = sbr.rel (0) target = $region33
    $region32: #{tpu_custom_call.1} parent=1 // pred_region
      %73 = dma.done [#allocation3], 128
    $region33: #{tpu_custom_call.1} parent=1 // pred_fallthru
      _
    // Predicated region
    $region34: #{tpu_custom_call.1} parent=1 // pred_check
      _
    $region35: #{tpu_custom_call.1} parent=1 // pred_check_branch
      %75 = sbr.rel (0) target = $region37
    $region36: #{tpu_custom_call.1} parent=1 // pred_region
      %77 = dma.done [#allocation6], 256
    $region37: #{tpu_custom_call.1} parent=1 // pred_fallthru
      _
    // Predicated region
    $region38: #{tpu_custom_call.1} parent=1 // pred_check
      _
    $region39: #{tpu_custom_call.1} parent=1 // pred_check_branch
      %79 = sbr.rel (0) target = $region41
    $region40: #{tpu_custom_call.1} parent=1 // pred_region
      %81 = dma.done [#allocation6], 16
    $region41: #{tpu_custom_call.1} parent=1 // pred_fallthru
      _
    // Predicated region
    $region42: #{tpu_custom_call.1} parent=1 // pred_check
      _
    $region43: #{tpu_custom_call.1} parent=1 // pred_check_branch
      %83 = sbr.rel (0) target = $region45
    $region44: #{tpu_custom_call.1} parent=1 // pred_region
      %85 = dma.done [#allocation9], 512
    $region45: #{tpu_custom_call.1} parent=1 // pred_fallthru
      _
    %v87 = vld [vmem:[#allocation2] sm:$0xff]
    %v88 = vpack.c.bf16 %v87, %v87
    %v89 = vld [vmem:[#allocation5] sm:$0xf]
    %v90 = vld [vmem:[#allocation5 + $0x4] sm:$0xf]
    %v91 = vld [vmem:[#allocation5 + $0x8] sm:$0xf]
    %v92 = vld [vmem:[#allocation5 + $0xc] sm:$0xf]
    %v93 = vld [vmem:[#allocation7] sm:$0x1]
    %v95 = vperm.slane %v93, 0
    %v101 = vunpack.c.l.b16 %v89
    %v102 = vunpack.c.l.b16 %v90
    %v103 = vunpack.c.l.b16 %v91
    %v104 = vunpack.c.l.b16 %v92
    %v105 = vpack.c.b16 %v102, %v101
    %v106 = vpack.c.b16 %v104, %v103
    %vm109 = vcmask 261120
    %v111 = vsel %vm109, %v88, 0
    %113 = vmatpush.bf16.msra.mxu0 0
    %114 = vmatpush.bf16.msra.mxu0 0
    %115 = vmatpush.bf16.msra.mxu0 0
    %116 = vmatpush.bf16.msra.mxu0 0
    %117 = vmatpush.bf16.msra.mxu0 0
    %118 = vmatpush.bf16.msra.mxu0 0
    %119 = vmatpush.bf16.msra.mxu0 %v106
    %120 = vmatpush.bf16.msra.mxu0 %v105
    %121 = vmatmul.bf16.gmra.mxu0 %v111
    %v122 = vpop.f32.mrf.mxu0
    %v123 = vadd.f32 %v95, %v122
    %v124 = vpop.f32.mrf.mxu0
    %125 = vdwg.mxu0
    %v126 = vmax.f32 %v123, 0.0
    %v127 = vpack.c.bf16 %v126, %v126
    %v128 = vld [vmem:[#allocation8] sm:$0xff]
    %v129 = vld [vmem:[#allocation8 + $0x8] sm:$0xff]
    %v130 = vld [vmem:[#allocation8 + $0x10] sm:$0xff]
    %v131 = vld [vmem:[#allocation8 + $0x18] sm:$0xff]
    %v132 = vld [vmem:[%s4] sm:$0x3]
    %v134 = vperm.slane %v132, 0
    %v135 = vperm.slane %v132, 1
    %v142 = vunpack.c.l.b16 %v128
    %v143 = vunpack.c.h.b16 %v128
    %v144 = vunpack.c.l.b16 %v129
    %v145 = vunpack.c.h.b16 %v129
    %v146 = vunpack.c.l.b16 %v130
    %v147 = vunpack.c.h.b16 %v130
    %v148 = vunpack.c.l.b16 %v131
    %v149 = vunpack.c.h.b16 %v131
    %v150 = vpack.c.b16 %v144, %v142
    %v151 = vpack.c.b16 %v145, %v143
    %v152 = vpack.c.b16 %v148, %v146
    %v153 = vpack.c.b16 %v149, %v147
    %v159 = vsel %vm109, %v127, 0
    %161 = vmatpush.bf16.msra.mxu0 0
    %162 = vmatpush.bf16.msra.mxu0 0
    %163 = vmatpush.bf16.msra.mxu0 0
    %164 = vmatpush.bf16.msra.mxu0 0
    %165 = vmatpush.bf16.msra.mxu0 0
    %166 = vmatpush.bf16.msra.mxu0 0
    %167 = vmatpush.bf16.msra.mxu0 %v152
    %168 = vmatpush.bf16.msra.mxu0 %v150
    %169 = vmatmul.bf16.gmra.mxu0 %v159
    %v170 = vpop.f32.mrf.mxu0
    %v171 = vadd.f32 %v134, %v170
    %v172 = vpop.f32.mrf.mxu0
    %173 = vdwg.mxu0
    %174 = vmatpush.bf16.msra.mxu0 0
    %175 = vmatpush.bf16.msra.mxu0 0
    %176 = vmatpush.bf16.msra.mxu0 0
    %177 = vmatpush.bf16.msra.mxu0 0
    %178 = vmatpush.bf16.msra.mxu0 0
    %179 = vmatpush.bf16.msra.mxu0 0
    %180 = vmatpush.bf16.msra.mxu0 %v153
    %181 = vmatpush.bf16.msra.mxu0 %v151
    %182 = vmatmul.bf16.gmra.mxu0 %v159
    %v183 = vpop.f32.mrf.mxu0
    %v184 = vadd.f32 %v135, %v183
    %v185 = vpop.f32.mrf.mxu0
    %186 = vdwg.mxu0
    %v187 = vmax.f32 %v171, 0.0
    %v188 = vmax.f32 %v184, 0.0
    %v189 = vld [vmem:[%s5] sm:$0x3]
    %v191 = vperm.slane %v189, 0
    %v192 = vperm.slane %v189, 1
    %v195 = vmul.f32 %v187, %v191
    %v196 = vmul.f32 %v188, %v192
    %v197 = vlaneseq
    %v198 = vand.u32 %v197, 127
    %v199 = vld [vmem:[%s6] sm:$0x1]
    %v200 = vsel %vm109, %v195, 0.0
    %201 = vadd.xlane.f32.xlu0 %v200
    %v202 = vpop.xlane.xlu0 %201
    %vm203 = vcmp.eq.s32.totalorder %v198, 0
    %v204 = vsel %vm203, 1, 0
    %v205 = vcvt.s32.f32 %v204
    %v206 = vmul.f32 %v202, %v205
    %v208 = vperm.slane %v199, 0
    %v210 = vadd.f32 %v208, %v206
    %212 = vrot.lane.b32.xlu0 %v195, 96
    %v213 = vpop.permute.xlu0 %212
    %v215 = vsel %vm109, %v213, 0.0
    %216 = vadd.xlane.f32.xlu0 %v215
    %v217 = vpop.xlane.xlu0 %216
    %vm218 = vcmp.eq.s32.totalorder %v198, 1
    %v219 = vsel %vm218, 1, 0
    %v220 = vcvt.s32.f32 %v219
    %v221 = vmul.f32 %v217, %v220
    %v222 = vadd.f32 %v210, %v221
    %223 = vrot.lane.b32.xlu0 %v195, 64
    %v224 = vpop.permute.xlu0 %223
    %v226 = vsel %vm109, %v224, 0.0
    %227 = vadd.xlane.f32.xlu0 %v226
    %v228 = vpop.xlane.xlu0 %227
    %vm229 = vcmp.eq.s32.totalorder %v198, 2
    %v230 = vsel %vm229, 1, 0
    %v231 = vcvt.s32.f32 %v230
    %v232 = vmul.f32 %v228, %v231
    %v233 = vadd.f32 %v222, %v232
    %234 = vrot.lane.b32.xlu0 %v195, 32
    %v235 = vpop.permute.xlu0 %234
    %v237 = vsel %vm109, %v235, 0.0
    %238 = vadd.xlane.f32.xlu0 %v237
    %v239 = vpop.xlane.xlu0 %238
    %vm240 = vcmp.eq.s32.totalorder %v198, 3
    %v241 = vsel %vm240, 1, 0
    %v242 = vcvt.s32.f32 %v241
    %v243 = vmul.f32 %v239, %v242
    %v244 = vadd.f32 %v233, %v243
    %v245 = vsel %vm109, %v196, 0.0
    %246 = vadd.xlane.f32.xlu0 %v245
    %v247 = vpop.xlane.xlu0 %246
    %vm248 = vcmp.eq.s32.totalorder %v198, 4
    %v249 = vsel %vm248, 1, 0
    %v250 = vcvt.s32.f32 %v249
    %v251 = vmul.f32 %v247, %v250
    %v252 = vadd.f32 %v244, %v251
    %vm253 = vcmask 64512
    %254 = vst.msk [vmem:[#allocation10] sm:$0xff] %vm253, %v252
    // Predicated region
    $region46: #{tpu_custom_call.1} parent=1 // pred_check
      _
    $region47: #{tpu_custom_call.1} parent=1 // pred_check_branch
      %256 = sbr.rel (0) target = $region49
    $region48: #{tpu_custom_call.1} parent=1 // pred_region
      %258 = vsyncadd [#allocation4], 0
      %s260 = sshll.u32 [#allocation10], 4
      %s261 = int_to_ptr.vmem [resolvable:$true] %s260
      %s262 = sshll.u32 %s7, 4
      %s263 = int_to_ptr.hbm [resolvable:$true] %s262
      %265 = dma.vmem_to_hbm [thread:$0]  %s261, 128, %s263, [#allocation4]
    $region49: #{tpu_custom_call.1} parent=1 // pred_fallthru
      _
    // Predicated region
    $region50: #{tpu_custom_call.1} parent=1 // pred_check
      _
    $region51: #{tpu_custom_call.1} parent=1 // pred_check_branch
      %267 = sbr.rel (0) target = $region53
    $region52: #{tpu_custom_call.1} parent=1 // pred_region
      %269 = dma.done [#allocation4], 128
    $region53: #{tpu_custom_call.1} parent=1 // pred_fallthru
      _
    %270 = vsyncpa [#allocation3], 1
    %271 = vsyncpa [#allocation6], 1
    %272 = vsyncpa [#allocation9], 1
    %273 = vsyncpa [#allocation4], 1

</llo_original>
